<compile_context>
chip_gen: v7x
topology: tpu7x:2x2x1
jax: 0.10.0
libtpu: 0.0.40
codegen_flags: <defaults>
</compile_context>

<pallas_src>
import functools

import jax
import jax.numpy as jnp
from jax.experimental import pallas as pl
from jax.experimental.pallas import tpu as pltpu


def _channel_conv_gate(w_ref, y, channels):
    """3-tap cross-correlation over channels (zero padded) + sigmoid.
    y: (C, 1) f32 per-channel mean.  z[c] = w0*y[c-1] + w1*y[c] + w2*y[c+1]."""
    y_up = pltpu.roll(y, shift=1, axis=0)                 # y[c-1] (wraps at 0)
    y_dn = pltpu.roll(y, shift=channels - 1, axis=0)      # y[c+1] (wraps at C-1)
    ch = jax.lax.broadcasted_iota(jnp.int32, y.shape, 0)
    y_up = jnp.where(ch == 0, 0.0, y_up)                  # zero-pad boundaries
    y_dn = jnp.where(ch == channels - 1, 0.0, y_dn)
    z = w_ref[0] * y_up + w_ref[1] * y + w_ref[2] * y_dn
    return jax.nn.sigmoid(z)                              # (C, 1) f32


def _fused_kernel(w_ref, x_ref, o_ref, *, channels, inv_s):
    # Single-pass path: the whole (C, S) per-batch slab is resident in VMEM.
    # w_ref: (3,) f32 SMEM; x_ref/o_ref: (1, C, S).
    y = jnp.sum(x_ref[0].astype(jnp.float32), axis=-1, keepdims=True) * inv_s
    g = _channel_conv_gate(w_ref, y, channels)
    xv = x_ref[0]
    o_ref[0] = (xv * g.astype(xv.dtype)).astype(o_ref.dtype)


def _pool_gate_kernel(w_ref, x_ref, g_ref, acc_ref, *, channels, ts, rem_last, inv_s):
    # w_ref:   (3,) f32 in SMEM      -- middle row of the 3x3 conv kernel
    # x_ref:   (1, C, ts) input tile -- channels on sublanes, spatial on lanes
    # g_ref:   (1, C, 1) f32 output  -- per-(b, c) sigmoid gate
    # acc_ref: (C, 128) f32 scratch  -- running per-channel lane-chunk sums
    j = pl.program_id(1)
    last = pl.num_programs(1) - 1

    @pl.when(j == 0)
    def _():
        acc_ref[...] = jnp.zeros_like(acc_ref)

    def add_chunk(off):
        acc_ref[...] += x_ref[:, :, pl.ds(off, 128)][0].astype(jnp.float32)

    def accum(num_chunks):
        # Per-128-lane-chunk VPU adds; the single cross-lane (XLU) reduce is
        # deferred to the epilogue, so the streaming loop is VPU/HBM only.
        if num_chunks <= 0:
            return
        unroll = 8
        groups = num_chunks // unroll
        start = 0
        if groups >= 2:
            @pl.loop(0, groups)
            def _(g):
                base = g * (unroll * 128)
                for u in range(unroll):
                    add_chunk(pl.multiple_of(base + u * 128, 128))
            start = groups * unroll
        for k in range(start, num_chunks):
            add_chunk(k * 128)

    full_tile_chunks = ts // 128
    if rem_last == ts:
        # Every tile (including the last) is fully valid: no masking needed.
        accum(full_tile_chunks)
    else:
        @pl.when(j < last)
        def _():
            accum(full_tile_chunks)

        @pl.when(j == last)
        def _():
            # Ragged last tile: only the first rem_last lanes are valid data;
            # the rest of the VMEM block is unspecified and must not be summed.
            full = rem_last // 128
            tail = rem_last - full * 128
            accum(full)
            if tail > 0:
                chunk = x_ref[:, :, pl.ds(full * 128, 128)][0].astype(jnp.float32)
                lane = jax.lax.broadcasted_iota(jnp.int32, chunk.shape, 1)
                acc_ref[...] += jnp.where(lane < tail, chunk, 0.0)

    @pl.when(j == last)
    def _():
        y = jnp.sum(acc_ref[...], axis=-1, keepdims=True) * inv_s   # (C, 1) mean
        g_ref[0] = _channel_conv_gate(w_ref, y, channels)


def _scale_kernel(g_ref, x_ref, o_ref):
    # g_ref: (1, C, 1) f32 gate; x_ref/o_ref: (1, C, ts)
    x = x_ref[0]
    o_ref[0] = (x * g_ref[0].astype(x.dtype)).astype(o_ref.dtype)


def _budgets():
    """Chip-generation-specific VMEM budgets.
    v7x: 64 MiB VMEM per TensorCore -> conservative; v5e/v6e: 128 MiB."""
    kind = ""
    try:
        kind = jax.devices()[0].device_kind.lower()
    except Exception:
        pass
    if "v7" in kind or "7x" in kind:
        return {"blk": 5 << 20, "fast": 28 << 20, "ceiling": 40 << 20}
    return {"blk": 12 << 20, "fast": 56 << 20, "ceiling": 80 << 20}


def _pick_lane_tile(s, c, itemsize, blk_budget):
    """Largest 128-multiple lane tile with c*ts*itemsize <= blk_budget.
    No divisor constraint: the ragged tail is handled in-kernel."""
    s_ceil = ((s + 127) // 128) * 128
    ts = (blk_budget // (c * itemsize)) // 128 * 128
    return int(max(128, min(ts, s_ceil)))


def eca_forward(x, conv_weight, *, force_streaming=False, lane_tile=None):
    """x: (b, c, h, w, t); conv_weight: (1, 1, 3, 3) as in nn.Conv2d(1,1,3,bias=False)."""
    b, c, h, w, t = x.shape
    s = h * w * t
    dtype = x.dtype
    itemsize = jnp.dtype(dtype).itemsize

    x_flat = x.reshape(b, c, s)                             # free reshape (contiguous)
    # Conv input has height 1 with padding 1 -> only the middle 3x3 row matters.
    w_mid = conv_weight[0, 0, 1, :].astype(jnp.float32)     # (3,)

    budgets = _budgets()
    inv_s = 1.0 / float(s)

    # ---------- Fast path: whole per-batch (c, s) slab resident in VMEM ----------
    slab = c * s
    # 2x double-buffered in + 2x out blocks + one f32 temp + margin.
    fast_need = 4 * slab * itemsize + 4 * slab + (2 << 20)
    if (not force_streaming) and fast_need <= budgets["fast"]:
        out_flat = pl.pallas_call(
            functools.partial(_fused_kernel, channels=c, inv_s=inv_s),
            out_shape=jax.ShapeDtypeStruct((b, c, s), dtype),
            grid_spec=pltpu.PrefetchScalarGridSpec(
                num_scalar_prefetch=0,
                grid=(b,),
                in_specs=[
                    pl.BlockSpec(memory_space=pltpu.MemorySpace.SMEM),   # 3 conv taps
                    pl.BlockSpec((1, c, s), lambda i: (i, 0, 0)),
                ],
                out_specs=pl.BlockSpec((1, c, s), lambda i: (i, 0, 0)),
            ),
            compiler_params=pltpu.CompilerParams(
                dimension_semantics=("parallel",),
                vmem_limit_bytes=int(min(budgets["ceiling"], fast_need + (12 << 20))),
            ),
        )(w_mid, x_flat)
        return out_flat.reshape(b, c, h, w, t)

    # ---------- Streaming two-pass path ----------
    s_ceil = ((s + 127) // 128) * 128
    if lane_tile is not None:
        assert lane_tile % 128 == 0
        ts = int(min(lane_tile, s_ceil))
    else:
        ts = _pick_lane_tile(s, c, itemsize, budgets["blk"])
    n_s = pl.cdiv(s, ts)
    rem_last = s - (n_s - 1) * ts          # static: valid lanes in the last tile

    blk = c * ts * itemsize
    vmem1 = int(min(budgets["ceiling"], max(8 << 20, 2 * blk + c * 512 + (4 << 20))))
    vmem2 = int(min(budgets["ceiling"], max(8 << 20, 4 * blk + (4 << 20))))

    # Pass 1: tiled per-(b, c) mean over S, fused 3-tap channel conv + sigmoid.
    gate = pl.pallas_call(
        functools.partial(_pool_gate_kernel, channels=c, ts=ts,
                          rem_last=rem_last, inv_s=inv_s),
        out_shape=jax.ShapeDtypeStruct((b, c, 1), jnp.float32),
        grid_spec=pltpu.PrefetchScalarGridSpec(
            num_scalar_prefetch=0,
            grid=(b, n_s),
            in_specs=[
                pl.BlockSpec(memory_space=pltpu.MemorySpace.SMEM),       # 3 conv taps
                pl.BlockSpec((1, c, ts), lambda i, j: (i, 0, j)),        # x tile
            ],
            out_specs=pl.BlockSpec((1, c, 1), lambda i, j: (i, 0, 0)),
            scratch_shapes=[pltpu.VMEM((c, 128), jnp.float32)],
        ),
        compiler_params=pltpu.CompilerParams(
            dimension_semantics=("parallel", "arbitrary"),
            vmem_limit_bytes=vmem1,
        ),
    )(w_mid, x_flat)
    # TODO(synk): on v7x with b == 1, split the S reduction across the two
    # TensorCores (grid (b, 2, n_s//2), partial gates + tiny combine) to use
    # both cores' HBM bandwidth in pass 1.

    # Pass 2: fully parallel broadcast multiply x * gate.
    out_flat = pl.pallas_call(
        _scale_kernel,
        out_shape=jax.ShapeDtypeStruct((b, c, s), dtype),
        grid_spec=pltpu.PrefetchScalarGridSpec(
            num_scalar_prefetch=0,
            grid=(b, n_s),
            in_specs=[
                pl.BlockSpec((1, c, 1), lambda i, j: (i, 0, 0)),
                pl.BlockSpec((1, c, ts), lambda i, j: (i, 0, j)),
            ],
            out_specs=pl.BlockSpec((1, c, ts), lambda i, j: (i, 0, j)),
        ),
        compiler_params=pltpu.CompilerParams(
            dimension_semantics=("parallel", "parallel"),
            vmem_limit_bytes=vmem2,
        ),
        # TODO(synk): if the caller can donate x, add input_output_aliases={1: 0}
        # here to make the multiply in-place in HBM (halves peak footprint).
    )(gate, x_flat)

    # TODO(synk): for extremely large C (>~16k channels) also tile the channel
    # axis; ECA channel counts in practice are far below that.
    return out_flat.reshape(b, c, h, w, t)


def eca_ref(x, conv_weight):
    # Pure-JAX reference mirroring the PyTorch forward.
    y = jnp.mean(x, axis=(2, 3, 4))                         # (b, c)
    w_mid = conv_weight[0, 0, 1, :]
    yp = jnp.pad(y, ((0, 0), (1, 1)))
    z = w_mid[0] * yp[:, :-2] + w_mid[1] * yp[:, 1:-1] + w_mid[2] * yp[:, 2:]
    a = jax.nn.sigmoid(z)
    return x * a[:, :, None, None, None]


if __name__ == "__main__":
    key = jax.random.PRNGKey(0)
    kx, kw = jax.random.split(key)
    # Deterministic synthetic Conv2d(1, 1, 3, bias=False) weight.
    conv_weight = jax.random.normal(kw, (1, 1, 3, 3), dtype=jnp.float32) * 0.3

    def check(shape, **kwargs):
        xx = jax.random.normal(kx, shape, dtype=jnp.float32)
        out = eca_forward(xx, conv_weight, **kwargs)
        jax.block_until_ready(out)
        ref = eca_ref(xx, conv_weight)
        assert out.shape == xx.shape
        err = float(jnp.max(jnp.abs(out - ref)))
        assert jnp.allclose(out, ref, atol=1e-5, rtol=1e-5), err

    # Fused single-pass path (slab fits VMEM), 128-aligned spatial size.
    check((2, 8, 8, 8, 4))
    # Fused path, ragged spatial size (s = 105, not a multiple of 128).
    check((2, 16, 5, 7, 3))
    # Streaming two-pass path with a ragged last tile (s = 210, ts = 128).
    check((2, 8, 6, 7, 5), force_streaming=True, lane_tile=128)
    # Streaming path, aligned multi-tile (s = 512, ts = 256).
    check((1, 16, 8, 8, 8), force_streaming=True, lane_tile=256)
    # Streaming path exercising the looped chunk accumulation (32 lane chunks).
    check((1, 8, 16, 16, 16), force_streaming=True, lane_tile=4096)

    print("KERNEL_OK")
</pallas_src>

<mosaic_0001>
module attributes {stable_mosaic.version = 11 : i64} {
  func.func @_fused_kernel(%arg0: i32, %arg1: memref<3xf32, #tpu.memory_space<smem>>, %arg2: memref<1x8x256xf32, #tpu.memory_space<vmem>>, %arg3: memref<1x8x256xf32, #tpu.memory_space<vmem>>) attributes {dimension_semantics = [#tpu.dimension_semantics<parallel>], iteration_bounds = array<i64: 2>, scalar_prefetch = 0 : i64, scratch_operands = 0 : i64, tpu.core_type = #tpu.core_type<tc>, window_params = [{transform_indices = @transform_0, window_bounds = array<i64: 3>}, {transform_indices = @transform_1, window_bounds = array<i64: 1, 8, 256>}, {transform_indices = @transform_2, window_bounds = array<i64: 1, 8, 256>}]} {
    %c0 = arith.constant 0 : index
    %c0_0 = arith.constant 0 : index
    %c0_1 = arith.constant 0 : index
    %0 = vector.load %arg2[%c0, %c0_0, %c0_1] : memref<1x8x256xf32, #tpu.memory_space<vmem>>, vector<1x8x256xf32>
    %1 = vector.shape_cast %0 : vector<1x8x256xf32> to vector<8x256xf32>
    %cst = arith.constant dense<0.000000e+00> : vector<8xf32>
    %2 = vector.multi_reduction <add>, %1, %cst [1] : vector<8x256xf32> to vector<8xf32>
    %3 = vector.shape_cast %2 : vector<8xf32> to vector<8x1xf32>
    %cst_2 = arith.constant 3.906250e-03 : f32
    %4 = vector.broadcast %cst_2 : f32 to vector<8x1xf32>
    %5 = arith.mulf %3, %4 : vector<8x1xf32>
    %c1_i32 = arith.constant 1 : i32
    %6 = tpu.dynamic_rotate %5 by %c1_i32 dim 0 : vector<8x1xf32>, i32 -> vector<8x1xf32>
    %c7_i32 = arith.constant 7 : i32
    %7 = tpu.dynamic_rotate %5 by %c7_i32 dim 0 : vector<8x1xf32>, i32 -> vector<8x1xf32>
    %8 = tpu.iota {dimensions = array<i32: 0>} : vector<8x1xi32>
    %c0_i32 = arith.constant 0 : i32
    %9 = vector.broadcast %c0_i32 : i32 to vector<8x1xi32>
    %10 = arith.cmpi eq, %8, %9 : vector<8x1xi32>
    %cst_3 = arith.constant 0.000000e+00 : f32
    %11 = vector.broadcast %cst_3 : f32 to vector<8x1xf32>
    %12 = arith.select %10, %11, %6 : vector<8x1xi1>, vector<8x1xf32>
    %c7_i32_4 = arith.constant 7 : i32
    %13 = vector.broadcast %c7_i32_4 : i32 to vector<8x1xi32>
    %14 = arith.cmpi eq, %8, %13 : vector<8x1xi32>
    %cst_5 = arith.constant 0.000000e+00 : f32
    %15 = vector.broadcast %cst_5 : f32 to vector<8x1xf32>
    %16 = arith.select %14, %15, %7 : vector<8x1xi1>, vector<8x1xf32>
    %c0_6 = arith.constant 0 : index
    %17 = memref.load %arg1[%c0_6] : memref<3xf32, #tpu.memory_space<smem>>
    %18 = vector.broadcast %17 : f32 to vector<8x1xf32>
    %19 = arith.mulf %18, %12 : vector<8x1xf32>
    %c1 = arith.constant 1 : index
    %20 = memref.load %arg1[%c1] : memref<3xf32, #tpu.memory_space<smem>>
    %21 = vector.broadcast %20 : f32 to vector<8x1xf32>
    %22 = arith.mulf %21, %5 : vector<8x1xf32>
    %23 = arith.addf %19, %22 : vector<8x1xf32>
    %c2 = arith.constant 2 : index
    %24 = memref.load %arg1[%c2] : memref<3xf32, #tpu.memory_space<smem>>
    %25 = vector.broadcast %24 : f32 to vector<8x1xf32>
    %26 = arith.mulf %25, %16 : vector<8x1xf32>
    %27 = arith.addf %23, %26 : vector<8x1xf32>
    %28 = arith.negf %27 : vector<8x1xf32>
    %29 = math.exp %28 : vector<8x1xf32>
    %cst_7 = arith.constant 1.000000e+00 : f32
    %30 = vector.broadcast %cst_7 : f32 to vector<8x1xf32>
    %31 = arith.addf %30, %29 : vector<8x1xf32>
    %32 = arith.divf %30, %31 : vector<8x1xf32>
    %c0_8 = arith.constant 0 : index
    %c0_9 = arith.constant 0 : index
    %c0_10 = arith.constant 0 : index
    %33 = vector.load %arg2[%c0_8, %c0_9, %c0_10] : memref<1x8x256xf32, #tpu.memory_space<vmem>>, vector<1x8x256xf32>
    %34 = vector.shape_cast %33 : vector<1x8x256xf32> to vector<8x256xf32>
    %35 = vector.broadcast %32 : vector<8x1xf32> to vector<8x256xf32>
    %36 = arith.mulf %34, %35 : vector<8x256xf32>
    %c0_11 = arith.constant 0 : index
    %c0_12 = arith.constant 0 : index
    %c0_13 = arith.constant 0 : index
    %37 = vector.load %arg3[%c0_11, %c0_12, %c0_13] : memref<1x8x256xf32, #tpu.memory_space<vmem>>, vector<1x8x256xf32>
    %38 = vector.shape_cast %37 : vector<1x8x256xf32> to vector<8x256xf32>
    %39 = vector.shape_cast %36 : vector<8x256xf32> to vector<1x8x256xf32>
    tpu.vector_store %arg3[%c0_11, %c0_12, %c0_13], %39 {strides = array<i32>} : memref<1x8x256xf32, #tpu.memory_space<vmem>>, vector<1x8x256xf32>,
    return
  }
  func.func @transform_0(%arg0: i32) -> i32 {
    %c0_i32 = arith.constant 0 : i32
    %c0_i32_0 = arith.constant 0 : i32
    return %c0_i32 : i32
  }
  func.func @transform_1(%arg0: i32) -> (i32, i32, i32) {
    %c0_i32 = arith.constant 0 : i32
    %c0_i32_0 = arith.constant 0 : i32
    %c0_i32_1 = arith.constant 0 : i32
    return %arg0, %c0_i32, %c0_i32_0 : i32, i32, i32
  }
  func.func @transform_2(%arg0: i32) -> (i32, i32, i32) {
    %c0_i32 = arith.constant 0 : i32
    %c0_i32_0 = arith.constant 0 : i32
    %c0_i32_1 = arith.constant 0 : i32
    return %arg0, %c0_i32, %c0_i32_0 : i32, i32, i32
  }
}

</mosaic_0001>

<llo_original>
// kernel: tpu_custom_call.1
$region0: #{tpu_custom_call.1}
  #allocation0 [shape = 'u32[]', space=smem, size = 0x4, offset = 0x4, fixed_abs, tag = 'smem constant byte address 0x4 - core index']
  #allocation1 [shape = 'u32[144,128]{1,0:T(1,128)}', space=vmem, size = 0x12000, scoped, tag = 'internal scratch']
  %s0 = inlined_call_operand.hbm [shape: f32[3], index: 0, kind: input, shape index: {}]
  %s1 = inlined_call_operand.hbm [shape: f32[2,8,256], index: 1, kind: input, shape index: {}]
  %s2 = inlined_call_operand.hbm [shape: f32[2,8,256], index: 2, kind: output, shape index: {}]
  %s3 = sld [smem:[#allocation0]]
  $region49: #{tpu_custom_call.1} parent=0
    _
  %s5 = ssub.s32 1, %s3
  %s6 = scalar_select 0, %s5, %s3
  $region1: #{tpu_custom_call.1} parent=0
    #allocation2 [shape = 'u8[512]{0}', space=smem, size = 0x200, scoped, tag = 'input window, operand 0, single buffered']
    #allocation3 [shape = 's32[2]{0}', space=sflag, size = 0x8, scoped, tag = 'scoped memory for tpu_custom_call.1']
    #allocation4 [shape = 's32[2]{0}', space=sflag, size = 0x8, scoped, tag = 'scoped memory for tpu_custom_call.1']
    #allocation5 [shape = 's32[2]{0}', space=sflag, size = 0x8, scoped, tag = 'scoped memory for tpu_custom_call.1']
    #allocation6 [shape = 'u8[16384]{0}', space=vmem, size = 0x4000, scoped, tag = 'input window, operand 1']
    #allocation7 [shape = 'u8[16384]{0}', space=vmem, size = 0x4000, scoped, tag = 'output window, operand 0']
    %7 = vsyncpa [#allocation5], 0
    %8 = vsyncpa [#allocation3], 0
    %s9 = scalar_lea.sflag [#allocation3], 1
    %10 = vsyncpa %s9, 0
    %11 = vsyncpa [#allocation4], 0
    %s12 = scalar_lea.sflag [#allocation4], 1
    %13 = vsyncpa %s12, 0
    loop: start=0, step=1, limit=4
    $region2: #{tpu_custom_call.1} parent=1 // loop_pre_header
      _
    $region3: #{tpu_custom_call.1} parent=1 // loop_header
      %s15 = sphi 0, %s19
      %p16 = scmp.ge.s32.totalorder %s15, 4
      %s23 = sphi 0, %s23
      %s25 = sphi 0, %s23
      %s26 = sphi 0, %s25
      %s40 = sphi 0, %s26
      %s46 = sphi 0, %s48
      %s49 = sphi 0, %s46
      %s50 = sphi 0, %s49
      %s66 = sphi 0, %s50
      %s72 = sphi 0, %s74
      %s75 = sphi 0, %s72
      %s76 = sphi 0, %s75
      %s92 = sphi 0, %s76
    $region4: #{tpu_custom_call.1} parent=1 // loop_header_branch
      %18 = sbr.rel (%p16) target = $region8
    $region5: #{tpu_custom_call.1} parent=1 // loop_body
      %s20 = ssub.s32 %s15, 1
      %s21 = ssub.s32 %s15, 2
      %s22 = sadd.s32 %s15, 1
      %s24 = sadd.s32 %s23, 1
      %p27 = scmp.eq.s32.totalorder %s15, 1
      %p28 = scmp.ne.s32.totalorder %s23, %s25
      %p29 = scmp.eq.s32.totalorder %s15, 0
      %p30 = por %p28, %p29
      %p31 = scmp.ne.s32.totalorder %s23, %s25
      %p32 = scmp.eq.s32.totalorder %s20, 1
      %p33 = por %p31, %p32
      %p34 = scmp.ne.s32.totalorder %s25, %s26
      %p35 = scmp.eq.s32.totalorder %s20, 0
      %p36 = por %p34, %p35
      %p37 = scmp.ne.s32.totalorder %s25, %s26
      %p38 = scmp.eq.s32.totalorder %s21, 1
      %p39 = por %p37, %p38
      %p41 = scmp.ne.s32.totalorder %s26, %s40
      %p42 = scmp.eq.s32.totalorder %s21, 0
      %p43 = por %p41, %p42
      %s44 = ssub.s32 %s15, %s22
      %p45 = scmp.eq.s32.totalorder %s44, 0
      %s47 = sadd.s32 %s46, 1
      %s48 = scalar_select %p45, %s46, %s47
      %p51 = pneg %p45
      %p52 = scmp.eq.s32.totalorder %s15, 1
      %p53 = por %p51, %p52
      %p54 = scmp.ne.s32.totalorder %s46, %s49
      %p55 = scmp.eq.s32.totalorder %s15, 0
      %p56 = por %p54, %p55
      %p57 = scmp.ne.s32.totalorder %s46, %s49
      %p58 = scmp.eq.s32.totalorder %s20, 1
      %p59 = por %p57, %p58
      %p60 = scmp.ne.s32.totalorder %s49, %s50
      %p61 = scmp.eq.s32.totalorder %s20, 0
      %p62 = por %p60, %p61
      %p63 = scmp.ne.s32.totalorder %s49, %s50
      %p64 = scmp.eq.s32.totalorder %s21, 1
      %p65 = por %p63, %p64
      %p67 = scmp.ne.s32.totalorder %s50, %s66
      %p68 = scmp.eq.s32.totalorder %s21, 0
      %p69 = por %p67, %p68
      %s70 = ssub.s32 %s15, %s22
      %p71 = scmp.eq.s32.totalorder %s70, 0
      %s73 = sadd.s32 %s72, 1
      %s74 = scalar_select %p71, %s72, %s73
      %p77 = pneg %p71
      %p78 = scmp.eq.s32.totalorder %s15, 1
      %p79 = por %p77, %p78
      %p80 = scmp.ne.s32.totalorder %s72, %s75
      %p81 = scmp.eq.s32.totalorder %s15, 0
      %p82 = por %p80, %p81
      %p83 = scmp.ne.s32.totalorder %s72, %s75
      %p84 = scmp.eq.s32.totalorder %s20, 1
      %p85 = por %p83, %p84
      %p86 = scmp.ne.s32.totalorder %s75, %s76
      %p87 = scmp.eq.s32.totalorder %s20, 0
      %p88 = por %p86, %p87
      %p89 = scmp.ne.s32.totalorder %s75, %s76
      %p90 = scmp.eq.s32.totalorder %s21, 1
      %p91 = por %p89, %p90
      %p93 = scmp.ne.s32.totalorder %s76, %s92
      %p94 = scmp.eq.s32.totalorder %s21, 0
      %p95 = por %p93, %p94
      %p96 = scmp.le.s32.totalorder 1, %s15
      %p97 = scmp.lt.s32.totalorder %s15, 3
      %p98 = pnand %p96, %p97
      %p99 = pneg %p98
      // Predicated region
      $region9: #{tpu_custom_call.1} parent=5 // pred_check
        _
      $region10: #{tpu_custom_call.1} parent=5 // pred_check_branch
        %101 = sbr.rel (%p98) target = $region12
      $region11: #{tpu_custom_call.1} parent=5 // pred_region
        %s102 = ssub.s32 %s15, 1
        // Predicated region
        $region13: #{tpu_custom_call.1} parent=11 // pred_check
          %p103 = pneg %p36
        $region14: #{tpu_custom_call.1} parent=11 // pred_check_branch
          %105 = sbr.rel (%p103) target = $region16
        $region15: #{tpu_custom_call.1} parent=11 // pred_region
          %s107 = ssub.s32 16, 16
          %108 = vsyncadd [#allocation5], %s107
          %111 = dma.hbm_to_smem %s0, 16, [#allocation2], [#allocation5]
        $region16: #{tpu_custom_call.1} parent=11 // pred_fallthru
          _
      $region12: #{tpu_custom_call.1} parent=5 // pred_fallthru
        _
      %p112 = scmp.lt.s32.totalorder %s15, 2
      // Predicated region
      $region17: #{tpu_custom_call.1} parent=5 // pred_check
        %p113 = pneg %p112
      $region18: #{tpu_custom_call.1} parent=5 // pred_check_branch
        %115 = sbr.rel (%p113) target = $region20
      $region19: #{tpu_custom_call.1} parent=5 // pred_region
        // Predicated region
        $region21: #{tpu_custom_call.1} parent=19 // pred_check
          %p116 = pneg %p56
        $region22: #{tpu_custom_call.1} parent=19 // pred_check_branch
          %118 = sbr.rel (%p116) target = $region24
        $region23: #{tpu_custom_call.1} parent=19 // pred_region
          %s119 = sand.u32 %s46, 1
          %s120 = scalar_lea.sflag [#allocation3], %s119
          %s121 = sand.u32 %s46, 1
          %s122 = smul.addr %s121, 16
          %s123 = scalar_lea.vmem [#allocation6], %s122
          %s125 = ssub.s32 256, 256
          %126 = vsyncadd %s120, %s125
          %s127 = smul.addr %s15, 2
          %s128 = smul.addr %s127, 128
          %s129 = scalar_lea.hbm %s1, %s128
          %s131 = sshll.u32 %s123, 4
          %s132 = int_to_ptr.vmem [resolvable:$true] %s131
          %134 = dma.hbm_to_vmem [thread:$0]  %s129, 256, %s132, %s120
        $region24: #{tpu_custom_call.1} parent=19 // pred_fallthru
          _
      $region20: #{tpu_custom_call.1} parent=5 // pred_fallthru
        _
      %p135 = scmp.le.s32.totalorder 1, %s15
      %p136 = scmp.lt.s32.totalorder %s15, 3
      %p137 = pnand %p135, %p136
      %p138 = pneg %p137
      // Predicated region
      $region25: #{tpu_custom_call.1} parent=5 // pred_check
        _
      $region26: #{tpu_custom_call.1} parent=5 // pred_check_branch
        %140 = sbr.rel (%p137) target = $region28
      $region27: #{tpu_custom_call.1} parent=5 // pred_region
        %s141 = ssub.s32 %s15, 1
        // Predicated region
        $region29: #{tpu_custom_call.1} parent=27 // pred_check
          %p142 = pneg %p36
        $region30: #{tpu_custom_call.1} parent=27 // pred_check_branch
          %144 = sbr.rel (%p142) target = $region32
        $region31: #{tpu_custom_call.1} parent=27 // pred_region
          %145 = dma.done [#allocation5], 16
        $region32: #{tpu_custom_call.1} parent=27 // pred_fallthru
          _
        %s146 = sand.u32 %s49, 1
        %s147 = scalar_lea.sflag [#allocation3], %s146
        %s148 = sand.u32 %s49, 1
        %s149 = smul.addr %s148, 16
        %s150 = scalar_lea.vmem [#allocation6], %s149
        // Predicated region
        $region33: #{tpu_custom_call.1} parent=27 // pred_check
          %p151 = pneg %p62
        $region34: #{tpu_custom_call.1} parent=27 // pred_check_branch
          %153 = sbr.rel (%p151) target = $region36
        $region35: #{tpu_custom_call.1} parent=27 // pred_region
          %154 = dma.done %s147, 256
        $region36: #{tpu_custom_call.1} parent=27 // pred_fallthru
          _
        %155 = sfence
        %p156 = pneg %p36
        %p157 = pneg %p33
        %s158 = sand.u32 %s49, 1
        %s159 = scalar_lea.sflag [#allocation3], %s158
        %s160 = sand.u32 %s49, 1
        %s161 = smul.addr %s160, 16
        %s162 = scalar_lea.vmem [#allocation6], %s161
        %p163 = pneg %p62
        %p164 = pneg %p59
        %p165 = pneg %p88
        %p166 = pneg %p85
        %s167 = sand.u32 %s75, 1
        %s168 = scalar_lea.sflag [#allocation4], %s167
        %s169 = sand.u32 %s75, 1
        %s170 = smul.addr %s169, 16
        %s171 = scalar_lea.vmem [#allocation7], %s170
        %v172 = vld [vmem:[%s150] sm:$0xff]
        %v173 = vld [vmem:[%s150 + $0x8] sm:$0xff]
        %v174 = vadd.f32 %v172, %v173
        %175 = vadd.xlane.f32.xlu0 %v174
        %v176 = vpop.xlane.xlu0 %175
        %v177 = vmul.f32 %v176, 0.00390625
        %v178 = vrot.slane %v177, 7
        %v179 = vrot.slane %v177, 1
        %v180 = vlaneseq
        %v181 = vshrl.u32 %v180, 7
        %vm182 = vcmp.eq.s32.totalorder %v181, 0
        %v183 = vsel %vm182, 0.0, %v178
        %vm184 = vcmp.eq.s32.totalorder %v181, 7
        %v185 = vsel %vm184, 0.0, %v179
        %s186 = sld [smem:[#allocation2]]
        %v187 = vstv %s186
        %v188 = vmul.f32 %v187, %v183
        %s189 = sld [smem:[#allocation2 + $0x1]]
        %v190 = vstv %s189
        %v191 = vmul.f32 %v190, %v177
        %v192 = vadd.f32 %v188, %v191
        %s193 = sld [smem:[#allocation2 + $0x2]]
        %v194 = vstv %s193
        %v195 = vmul.f32 %v194, %v185
        %v196 = vadd.f32 %v192, %v195
        %v197 = vxor.u32 %v196, 2147483648
        %v198 = vmul.f32 %v197, 1.442695
        %v199 = vpow.pop %v198
        %v200 = vadd.f32 %v199, 1.0
        %v201 = vrcp.pop %v200
        %v202 = vmul.f32 1.0, %v201
        %204 = vset.pattern.permute.xlu0 0
        %205 = vperm.xlu0 %204, %v202
        %v206 = vpop.permute.xlu0 %205
        %v208 = vmul.f32 %v172, %v206
        %v209 = vmul.f32 %v173, %v206
        %210 = vst [vmem:[%s171] sm:$0xff] %v208
        %211 = vst [vmem:[%s171 + $0x8] sm:$0xff] %v209
        %s212 = sand.u32 %s75, 1
        %s213 = scalar_lea.sflag [#allocation4], %s212
        %s214 = sand.u32 %s75, 1
        %s215 = smul.addr %s214, 16
        %s216 = scalar_lea.vmem [#allocation7], %s215
        // Predicated region
        $region37: #{tpu_custom_call.1} parent=27 // pred_check
          %p217 = pneg %p85
        $region38: #{tpu_custom_call.1} parent=27 // pred_check_branch
          %219 = sbr.rel (%p217) target = $region40
        $region39: #{tpu_custom_call.1} parent=27 // pred_region
          %s221 = ssub.s32 256, 256
          %222 = vsyncadd %s213, %s221
          %s223 = smul.addr %s20, 2
          %s224 = smul.addr %s223, 128
          %s225 = scalar_lea.hbm %s2, %s224
          %s227 = sshll.u32 %s216, 4
          %s228 = int_to_ptr.vmem [resolvable:$true] %s227
          %230 = dma.vmem_to_hbm [thread:$0]  %s228, 256, %s225, %s213
        $region40: #{tpu_custom_call.1} parent=27 // pred_fallthru
          _
      $region28: #{tpu_custom_call.1} parent=5 // pred_fallthru
        _
      %p231 = scmp.le.s32.totalorder 2, %s15
      // Predicated region
      $region41: #{tpu_custom_call.1} parent=5 // pred_check
        %p232 = pneg %p231
      $region42: #{tpu_custom_call.1} parent=5 // pred_check_branch
        %234 = sbr.rel (%p232) target = $region44
      $region43: #{tpu_custom_call.1} parent=5 // pred_region
        %s235 = ssub.s32 %s15, 2
        // Predicated region
        $region45: #{tpu_custom_call.1} parent=43 // pred_check
          %p236 = pneg %p91
        $region46: #{tpu_custom_call.1} parent=43 // pred_check_branch
          %238 = sbr.rel (%p236) target = $region48
        $region47: #{tpu_custom_call.1} parent=43 // pred_region
          %s239 = sand.u32 %s76, 1
          %s240 = scalar_lea.sflag [#allocation4], %s239
          %s241 = sand.u32 %s76, 1
          %s242 = smul.addr %s241, 16
          %s243 = scalar_lea.vmem [#allocation7], %s242
          %244 = dma.done %s240, 256
        $region48: #{tpu_custom_call.1} parent=43 // pred_fallthru
          _
      $region44: #{tpu_custom_call.1} parent=5 // pred_fallthru
        _
    $region6: #{tpu_custom_call.1} parent=1 // loop_footer
      %s19 = sadd.s32 1, %s15
    $region7: #{tpu_custom_call.1} parent=1 // loop_footer_branch
      %14 = sbr.rel target = $region3
    $region8: #{tpu_custom_call.1} parent=1 // loop_exit
      _
    %245 = vsyncpa [#allocation3], 1
    %s246 = scalar_lea.sflag [#allocation3], 1
    %247 = vsyncpa %s246, 1
    %248 = vsyncpa [#allocation4], 1
    %s249 = scalar_lea.sflag [#allocation4], 1
    %250 = vsyncpa %s249, 1
    %251 = vsyncpa [#allocation5], 1
    %s252 = scalar_lea.sflag [#allocation5], 1
    %253 = vsyncpa %s252, 1

</llo_original>
